<compile_context>
chip_gen: v5e
topology: v5e:2x2
jax: 0.10.0
libtpu: 0.0.40
codegen_flags: <defaults>
</compile_context>

<pallas_src>
import jax
import jax.numpy as jnp
from jax.experimental import pallas as pl
from jax.experimental.pallas import tpu as pltpu

_MiB = 1024 * 1024


def _round_up(n, m):
    return -(-n // m) * m


def _vmem_budget():
    """Per-generation VMEM limit (bytes): ~96 MiB on v5e/v6e, ~48 MiB on v7x."""
    try:
        info = pltpu.get_tpu_info()
        cap = int(getattr(info, "vmem_capacity_bytes", 64 * _MiB))
    except Exception:
        cap = 64 * _MiB  # conservative fallback (v7x per-TensorCore)
    return max(32 * _MiB, min(cap * 3 // 4, 96 * _MiB))


def _choose_l_tile(L, C, d_pad, out_bytes, vmem_budget, target=2048):
    """Largest multiple-of-8 L-tile <= target that fits the VMEM budget.

    Budget counts: double-buffered input block (C lane-padded to 128),
    double-buffered output block, and in-kernel temporaries (x_m1/x_p1/xcat).
    """
    lane = 128
    c_pad = _round_up(max(C, 1), lane)
    cat_pad = _round_up(max(3 * C, 1), lane)

    def vmem_bytes(tl):
        x_blk = 2 * tl * c_pad * 4                # double-buffered input block
        o_blk = 2 * tl * d_pad * out_bytes        # double-buffered output block
        tmp = tl * (2 * c_pad + cat_pad) * 4      # shifted copies + im2col concat
        return x_blk + o_blk + tmp

    tl = max(8, min(_round_up(target, 8), _round_up(L, 8)))
    while tl > 8 and vmem_bytes(tl) > vmem_budget:
        tl -= 8
    return tl


def fuse_conv_weight(weight, d_pad=None, dtype=jnp.float32):
    """PyTorch Conv1d weight (d_model, c_in, 3) -> fused im2col weight (3*c_in, d_pad).

    Rows are ordered (tap k, channel c) to match the in-kernel concat order
    [x[t-1], x[t], x[t+1]].  For repeated calls with the same weight this can be
    computed once and passed around (here it constant-folds under jit).
    """
    D, C, K = weight.shape
    assert K == 3, "TokenEmbedding uses kernel_size=3"
    if d_pad is None:
        d_pad = D
    w = jnp.transpose(weight, (2, 1, 0)).reshape(3 * C, D).astype(dtype)
    if d_pad > D:
        w = jnp.pad(w, ((0, 0), (0, d_pad - D)))
    return w


def token_embed_kernel(x_ref, halo_ref, w_ref, o_ref):
    # x_ref   : (1, TL, C)       current L-tile of the (circularly padded) input
    # halo_ref: (B*nt, 2, C)     RESIDENT: [row before tile, row after tile] per (b, tile)
    # w_ref   : (3*C, Dp)        RESIDENT: fused conv taps, rows ordered (tap k, channel c)
    # o_ref   : (1, TL, Dp)
    b = pl.program_id(0)
    j = pl.program_id(1)
    nt = pl.num_programs(1)

    tile = x_ref[0]                          # (TL, C)
    halo = halo_ref[b * nt + j]              # (2, C) -- VMEM lookup, no per-step DMA
    prev = halo[0:1, :]                      # x[tile_start - 1]  (circular)
    nxt = halo[1:2, :]                       # x[tile_end]        (circular)

    TL = tile.shape[0]
    row = jax.lax.broadcasted_iota(jnp.int32, (TL, 1), 0)

    # Circular shifts within the tile (XLU roll); edge rows patched from the halo.
    # x_m1[t] = x[t-1], x_p1[t] = x[t+1] (global circular indexing over the real L).
    x_m1 = jnp.where(row == 0, prev, pltpu.roll(tile, shift=1, axis=0))
    x_p1 = jnp.where(row == TL - 1, nxt, pltpu.roll(tile, shift=TL - 1, axis=0))

    # im2col: one fused MXU matmul instead of 3 separate K=C dots.
    xcat = jnp.concatenate([x_m1, tile, x_p1], axis=-1)           # (TL, 3C)
    out = jnp.dot(xcat, w_ref[...], preferred_element_type=jnp.float32)
    o_ref[0] = out.astype(o_ref.dtype)


def token_embedding(x, weight, *, l_tile=None, out_dtype=None):
    """x: (B, L, c_in); weight: (d_model, c_in, 3) (PyTorch Conv1d layout).

    out_dtype: defaults to x.dtype (semantics-preserving).  Passing
    jnp.bfloat16 halves the dominant (B, L, d_model) store traffic if the
    consumer accepts bf16 activations.
    """
    B, L, C = x.shape
    D = weight.shape[0]
    out_dtype = x.dtype if out_dtype is None else out_dtype
    out_bytes = jnp.dtype(out_dtype).itemsize

    # Lane-dense output: pad d_model up to a multiple of 128 (avoids masked vst).
    Dp = _round_up(max(D, 1), 128)

    vmem_limit = _vmem_budget()
    if l_tile is None:
        l_tile = _choose_l_tile(L, C, Dp, out_bytes, int(vmem_limit * 0.8))
    TL = max(8, (min(l_tile, _round_up(L, 8)) // 8) * 8)
    nt = -(-L // TL)

    # v7x has 2 TensorCores sharing HBM: avoid a 1-step parallel grid when L allows.
    if B * nt < 2 and L > 8:
        TL = max(8, ((L // 2) // 8) * 8)
        nt = -(-L // TL)

    Lp = nt * TL
    pad = Lp - L
    if pad:
        # Circular pad so the last real row's +1 neighbour (taken via in-tile roll)
        # is x[:, 0]; padded output rows are sliced off below.
        reps = -(-pad // L)
        x_in = jnp.concatenate([x, jnp.tile(x, (1, reps, 1))[:, :pad, :]], axis=1)
    else:
        x_in = x

    # Fused weight (could be hoisted / precomputed; constant-folds under jit).
    w_flat = fuse_conv_weight(weight, d_pad=Dp, dtype=jnp.float32)

    # Halo rows for every (batch, tile): x[:, tile_start - 1] and x[:, tile_end],
    # both circular over the ORIGINAL L.  Tiny (B*nt, 2, C) array kept resident.
    prev_idx = jnp.array([(j * TL - 1) % L for j in range(nt)], dtype=jnp.int32)
    next_idx = jnp.array([((j + 1) * TL) % L for j in range(nt)], dtype=jnp.int32)
    halo = jnp.stack([x[:, prev_idx, :], x[:, next_idx, :]], axis=2)   # (B, nt, 2, C)
    halo = halo.reshape(B * nt, 2, C)

    cost = pl.CostEstimate(
        flops=2 * B * Lp * (3 * C) * Dp,
        transcendentals=0,
        bytes_accessed=(B * Lp * C * x.dtype.itemsize
                        + B * Lp * Dp * out_bytes
                        + 3 * C * Dp * 4
                        + B * nt * 2 * C * x.dtype.itemsize),
    )

    out = pl.pallas_call(
        token_embed_kernel,
        out_shape=jax.ShapeDtypeStruct((B, Lp, Dp), out_dtype),
        grid=(B, nt),
        in_specs=[
            pl.BlockSpec((1, TL, C), lambda b, j: (b, j, 0)),
            # Resident side inputs: constant block index -> DMA'd once, reused.
            pl.BlockSpec((B * nt, 2, C), lambda b, j: (0, 0, 0)),
            pl.BlockSpec((3 * C, Dp), lambda b, j: (0, 0)),
        ],
        out_specs=pl.BlockSpec((1, TL, Dp), lambda b, j: (b, j, 0)),
        compiler_params=pltpu.CompilerParams(
            dimension_semantics=("parallel", "parallel"),
            vmem_limit_bytes=vmem_limit,
        ),
        cost_estimate=cost,
    )(x_in, halo, w_flat)

    return out[:, :L, :D]


def token_embedding_ref(x, weight):
    """Pure-JAX f32 reference matching PyTorch circular Conv1d (k=3, pad=1, no bias)."""
    L = x.shape[1]
    xp = jnp.concatenate([x[:, -1:, :], x, x[:, :1, :]], axis=1)   # (B, L+2, C)
    out = 0.0
    for k in range(3):
        out = out + jnp.einsum('blc,oc->blo', xp[:, k:k + L, :], weight[:, :, k])
    return out


def _check(x, weight, **kwargs):
    out = jax.block_until_ready(token_embedding(x, weight, **kwargs))
    ref = token_embedding_ref(x, weight)
    assert out.shape == ref.shape, (out.shape, ref.shape)
    err = jnp.max(jnp.abs(out.astype(jnp.float32) - ref))
    assert jnp.allclose(out.astype(jnp.float32), ref, atol=2e-2, rtol=2e-2), \
        f"max abs err = {err}"
    return out


if __name__ == "__main__":
    B, C_IN, D_MODEL = 2, 4, 32
    key = jax.random.PRNGKey(0)
    kx, kw, kx2 = jax.random.split(key, 3)

    # Conv1d weight shape: (d_model, c_in, kernel_size=3)
    weight = jax.random.normal(kw, (D_MODEL, C_IN, 3), dtype=jnp.float32) * 0.1

    # Case 1: L divisible by the tile; l_tile=8 -> 2 L-tiles per batch element
    # (exercises the inter-tile halo and the circular wrap-around boundary).
    x1 = jax.random.normal(kx, (B, 16, C_IN), dtype=jnp.float32)
    _check(x1, weight, l_tile=8)

    # Case 2: awkward L (not a multiple of the tile) -> exercises the pad-and-slice
    # path that replaces the old whole-L fallback (nt=3, Lp=24).
    x2 = jax.random.normal(kx2, (B, 20, C_IN), dtype=jnp.float32)
    _check(x2, weight, l_tile=8)

    # Case 3: default tile selection (VMEM-budgeted chooser).
    _check(x1, weight)

    print("KERNEL_OK")
</pallas_src>

<mosaic_0001>
module attributes {stable_mosaic.version = 11 : i64} {
  func.func @token_embed_kernel(%arg0: i32, %arg1: i32, %arg2: memref<1x8x4xf32, #tpu.memory_space<vmem>>, %arg3: memref<4x2x4xf32, #tpu.memory_space<vmem>>, %arg4: memref<12x128xf32, #tpu.memory_space<vmem>>, %arg5: memref<1x8x128xf32, #tpu.memory_space<vmem>>) attributes {dimension_semantics = [#tpu.dimension_semantics<parallel>, #tpu.dimension_semantics<parallel>], iteration_bounds = array<i64: 2, 2>, scalar_prefetch = 0 : i64, scratch_operands = 0 : i64, tpu.core_type = #tpu.core_type<tc>, window_params = [{transform_indices = @transform_0, window_bounds = array<i64: 1, 8, 4>}, {pipeline_mode = #tpu.pipeline_mode<synchronous>, transform_indices = @transform_1, window_bounds = array<i64: 4, 2, 4>}, {pipeline_mode = #tpu.pipeline_mode<synchronous>, transform_indices = @transform_2, window_bounds = array<i64: 12, 128>}, {transform_indices = @transform_3, window_bounds = array<i64: 1, 8, 128>}]} {
    %c0 = arith.constant 0 : index
    %c0_0 = arith.constant 0 : index
    %c0_1 = arith.constant 0 : index
    %0 = vector.load %arg2[%c0, %c0_0, %c0_1] : memref<1x8x4xf32, #tpu.memory_space<vmem>>, vector<1x8x4xf32>
    %1 = vector.shape_cast %0 : vector<1x8x4xf32> to vector<8x4xf32>
    %c2_i32 = arith.constant 2 : i32
    %2 = arith.muli %arg0, %c2_i32 : i32
    %3 = arith.addi %2, %arg1 : i32
    %4 = arith.index_cast %3 : i32 to index
    %c0_2 = arith.constant 0 : index
    %c0_3 = arith.constant 0 : index
    %5 = vector.load %arg3[%4, %c0_2, %c0_3] : memref<4x2x4xf32, #tpu.memory_space<vmem>>, vector<1x2x4xf32>
    %6 = vector.shape_cast %5 : vector<1x2x4xf32> to vector<2x4xf32>
    %7 = vector.extract_strided_slice %6 {offsets = [0, 0], sizes = [1, 4], strides = [1, 1]} : vector<2x4xf32> to vector<1x4xf32>
    %8 = vector.extract_strided_slice %6 {offsets = [1, 0], sizes = [1, 4], strides = [1, 1]} : vector<2x4xf32> to vector<1x4xf32>
    %9 = tpu.iota {dimensions = array<i32: 0>} : vector<8x1xi32>
    %c0_i32 = arith.constant 0 : i32
    %10 = vector.broadcast %c0_i32 : i32 to vector<8x1xi32>
    %11 = arith.cmpi eq, %9, %10 : vector<8x1xi32>
    %c1_i32 = arith.constant 1 : i32
    %12 = tpu.dynamic_rotate %1 by %c1_i32 dim 0 : vector<8x4xf32>, i32 -> vector<8x4xf32>
    %13 = vector.shape_cast %11 : vector<8x1xi1> to vector<8x1xi1>
    %14 = vector.broadcast %13 : vector<8x1xi1> to vector<8x4xi1>
    %15 = vector.shape_cast %7 : vector<1x4xf32> to vector<1x4xf32>
    %16 = vector.broadcast %15 : vector<1x4xf32> to vector<8x4xf32>
    %17 = arith.select %14, %16, %12 : vector<8x4xi1>, vector<8x4xf32>
    %c7_i32 = arith.constant 7 : i32
    %18 = vector.broadcast %c7_i32 : i32 to vector<8x1xi32>
    %19 = arith.cmpi eq, %9, %18 : vector<8x1xi32>
    %c7_i32_4 = arith.constant 7 : i32
    %20 = tpu.dynamic_rotate %1 by %c7_i32_4 dim 0 : vector<8x4xf32>, i32 -> vector<8x4xf32>
    %21 = vector.shape_cast %19 : vector<8x1xi1> to vector<8x1xi1>
    %22 = vector.broadcast %21 : vector<8x1xi1> to vector<8x4xi1>
    %23 = vector.shape_cast %8 : vector<1x4xf32> to vector<1x4xf32>
    %24 = vector.broadcast %23 : vector<1x4xf32> to vector<8x4xf32>
    %25 = arith.select %22, %24, %20 : vector<8x4xi1>, vector<8x4xf32>
    %26 = tpu.concatenate %17, %1, %25 in 1 : vector<8x4xf32>, vector<8x4xf32>, vector<8x4xf32> -> vector<8x12xf32>
    %c0_5 = arith.constant 0 : index
    %c0_6 = arith.constant 0 : index
    %27 = vector.load %arg4[%c0_5, %c0_6] : memref<12x128xf32, #tpu.memory_space<vmem>>, vector<12x128xf32>
    %cst = arith.constant dense<0.000000e+00> : vector<8x128xf32>
    %28 = tpu.matmul %26, %27, %cst {dimension_numbers = #tpu.dot_dimension_numbers<[1], [0], [0], [1], [0, 0, 1, 1], [], []>} : vector<8x12xf32>, vector<12x128xf32>, vector<8x128xf32> -> vector<8x128xf32>
    %c0_7 = arith.constant 0 : index
    %c0_8 = arith.constant 0 : index
    %c0_9 = arith.constant 0 : index
    %29 = vector.load %arg5[%c0_7, %c0_8, %c0_9] : memref<1x8x128xf32, #tpu.memory_space<vmem>>, vector<1x8x128xf32>
    %30 = vector.shape_cast %29 : vector<1x8x128xf32> to vector<8x128xf32>
    %31 = vector.shape_cast %28 : vector<8x128xf32> to vector<1x8x128xf32>
    tpu.vector_store %arg5[%c0_7, %c0_8, %c0_9], %31 {strides = array<i32>} : memref<1x8x128xf32, #tpu.memory_space<vmem>>, vector<1x8x128xf32>,
    return
  }
  func.func @transform_0(%arg0: i32, %arg1: i32) -> (i32, i32, i32) {
    %c0_i32 = arith.constant 0 : i32
    %c0_i32_0 = arith.constant 0 : i32
    return %arg0, %arg1, %c0_i32 : i32, i32, i32
  }
  func.func @transform_1(%arg0: i32, %arg1: i32) -> (i32, i32, i32) {
    %c0_i32 = arith.constant 0 : i32
    %c0_i32_0 = arith.constant 0 : i32
    %c0_i32_1 = arith.constant 0 : i32
    %c0_i32_2 = arith.constant 0 : i32
    return %c0_i32, %c0_i32_0, %c0_i32_1 : i32, i32, i32
  }
  func.func @transform_2(%arg0: i32, %arg1: i32) -> (i32, i32) {
    %c0_i32 = arith.constant 0 : i32
    %c0_i32_0 = arith.constant 0 : i32
    %c0_i32_1 = arith.constant 0 : i32
    return %c0_i32, %c0_i32_0 : i32, i32
  }
  func.func @transform_3(%arg0: i32, %arg1: i32) -> (i32, i32, i32) {
    %c0_i32 = arith.constant 0 : i32
    %c0_i32_0 = arith.constant 0 : i32
    return %arg0, %arg1, %c0_i32 : i32, i32, i32
  }
}

</mosaic_0001>

<llo_original>
// kernel: tpu_custom_call.1
$region0: #{tpu_custom_call.1}
  #allocation0 [shape = 'u32[]', space=smem, size = 0x4, offset = 0x4, fixed_abs, tag = 'smem constant byte address 0x4 - core index']
  #allocation1 [shape = 'u32[72,128]{1,0:T(1,128)}', space=vmem, size = 0x9000, scoped, tag = 'internal scratch']
  %s0 = inlined_call_operand.vmem [shape: f32[2,16,4], index: 0, kind: input, shape index: {}]
  %s1 = inlined_call_operand.vmem [shape: f32[4,2,4], index: 1, kind: input, shape index: {}]
  %s2 = inlined_call_operand.vmem [shape: f32[12,128], index: 2, kind: input, shape index: {}]
  %s3 = inlined_call_operand.hbm [shape: f32[2,16,128], index: 3, kind: output, shape index: {}]
  %s4 = sld [smem:[#allocation0]]
  $region45: #{tpu_custom_call.1} parent=0
    _
  %s6 = ssub.s32 1, %s4
  %s7 = scalar_select 0, %s6, %s4
  $region1: #{tpu_custom_call.1} parent=0
    #allocation2 [shape = 'u8[8192]{0}', space=vmem, size = 0x2000, scoped, tag = 'output window, operand 0']
    #allocation3 [shape = 's32[2]{0}', space=sflag, size = 0x8, scoped, tag = 'scoped memory for tpu_custom_call.1']
    %8 = vsyncpa [#allocation3], 0
    %s9 = scalar_lea.sflag [#allocation3], 1
    %10 = vsyncpa %s9, 0
    loop: start=0, step=1, limit=6
    $region2: #{tpu_custom_call.1} parent=1 // loop_pre_header
      _
    $region3: #{tpu_custom_call.1} parent=1 // loop_header
      %s12 = sphi 0, %s16
      %p13 = scmp.ge.s32.totalorder %s12, 6
      %s19 = sphi 0, %s31
      %s20 = sphi 0, %s27
      %s21 = sphi 0, %s19
      %s22 = sphi 0, %s20
      %s23 = sphi 0, %s21
      %s24 = sphi 0, %s22
      %s36 = sphi 0, %s38
      %s39 = sphi 0, %s36
      %s40 = sphi 0, %s39
      %s56 = sphi 0, %s40
      %s60 = sphi 0, %s60
      %s62 = sphi 0, %s60
      %s63 = sphi 0, %s62
      %s77 = sphi 0, %s63
      %s81 = sphi 0, %s81
      %s83 = sphi 0, %s81
      %s84 = sphi 0, %s83
      %s98 = sphi 0, %s84
      %s106 = sphi 0, %s108
      %s109 = sphi 0, %s106
      %s110 = sphi 0, %s109
      %s126 = sphi 0, %s110
    $region4: #{tpu_custom_call.1} parent=1 // loop_header_branch
      %15 = sbr.rel (%p13) target = $region8
    $region5: #{tpu_custom_call.1} parent=1 // loop_body
      %s17 = ssub.s32 %s12, 1
      %s18 = ssub.s32 %s12, 2
      %s25 = sadd.s32 1, %s20
      %p26 = scmp.ge.s32.totalorder %s25, 2
      %s27 = scalar_select %p26, 0, %s25
      %s28 = sadd.s32 1, %s19
      %s29 = scalar_select %p26, %s28, %s19
      %p30 = scmp.ge.s32.totalorder %s29, 2
      %s31 = scalar_select %p30, 0, %s29
      %s32 = ssub.s32 %s19, %s31
      %s33 = ssub.s32 %s20, %s27
      %s34 = sor.u32 %s32, %s33
      %p35 = scmp.eq.s32.totalorder %s34, 0
      %s37 = sadd.s32 %s36, 1
      %s38 = scalar_select %p35, %s36, %s37
      %p41 = pneg %p35
      %p42 = scmp.eq.s32.totalorder %s12, 3
      %p43 = por %p41, %p42
      %p44 = scmp.ne.s32.totalorder %s36, %s39
      %p45 = scmp.eq.s32.totalorder %s12, 0
      %p46 = por %p44, %p45
      %p47 = scmp.ne.s32.totalorder %s36, %s39
      %p48 = scmp.eq.s32.totalorder %s17, 3
      %p49 = por %p47, %p48
      %p50 = scmp.ne.s32.totalorder %s39, %s40
      %p51 = scmp.eq.s32.totalorder %s17, 0
      %p52 = por %p50, %p51
      %p53 = scmp.ne.s32.totalorder %s39, %s40
      %p54 = scmp.eq.s32.totalorder %s18, 3
      %p55 = por %p53, %p54
      %p57 = scmp.ne.s32.totalorder %s40, %s56
      %p58 = scmp.eq.s32.totalorder %s18, 0
      %p59 = por %p57, %p58
      %s61 = sadd.s32 %s60, 1
      %p64 = scmp.eq.s32.totalorder %s12, 3
      %p65 = scmp.ne.s32.totalorder %s60, %s62
      %p66 = scmp.eq.s32.totalorder %s12, 0
      %p67 = por %p65, %p66
      %p68 = scmp.ne.s32.totalorder %s60, %s62
      %p69 = scmp.eq.s32.totalorder %s17, 3
      %p70 = por %p68, %p69
      %p71 = scmp.ne.s32.totalorder %s62, %s63
      %p72 = scmp.eq.s32.totalorder %s17, 0
      %p73 = por %p71, %p72
      %p74 = scmp.ne.s32.totalorder %s62, %s63
      %p75 = scmp.eq.s32.totalorder %s18, 3
      %p76 = por %p74, %p75
      %p78 = scmp.ne.s32.totalorder %s63, %s77
      %p79 = scmp.eq.s32.totalorder %s18, 0
      %p80 = por %p78, %p79
      %s82 = sadd.s32 %s81, 1
      %p85 = scmp.eq.s32.totalorder %s12, 3
      %p86 = scmp.ne.s32.totalorder %s81, %s83
      %p87 = scmp.eq.s32.totalorder %s12, 0
      %p88 = por %p86, %p87
      %p89 = scmp.ne.s32.totalorder %s81, %s83
      %p90 = scmp.eq.s32.totalorder %s17, 3
      %p91 = por %p89, %p90
      %p92 = scmp.ne.s32.totalorder %s83, %s84
      %p93 = scmp.eq.s32.totalorder %s17, 0
      %p94 = por %p92, %p93
      %p95 = scmp.ne.s32.totalorder %s83, %s84
      %p96 = scmp.eq.s32.totalorder %s18, 3
      %p97 = por %p95, %p96
      %p99 = scmp.ne.s32.totalorder %s84, %s98
      %p100 = scmp.eq.s32.totalorder %s18, 0
      %p101 = por %p99, %p100
      %s102 = ssub.s32 %s19, %s31
      %s103 = ssub.s32 %s20, %s27
      %s104 = sor.u32 %s102, %s103
      %p105 = scmp.eq.s32.totalorder %s104, 0
      %s107 = sadd.s32 %s106, 1
      %s108 = scalar_select %p105, %s106, %s107
      %p111 = pneg %p105
      %p112 = scmp.eq.s32.totalorder %s12, 3
      %p113 = por %p111, %p112
      %p114 = scmp.ne.s32.totalorder %s106, %s109
      %p115 = scmp.eq.s32.totalorder %s12, 0
      %p116 = por %p114, %p115
      %p117 = scmp.ne.s32.totalorder %s106, %s109
      %p118 = scmp.eq.s32.totalorder %s17, 3
      %p119 = por %p117, %p118
      %p120 = scmp.ne.s32.totalorder %s109, %s110
      %p121 = scmp.eq.s32.totalorder %s17, 0
      %p122 = por %p120, %p121
      %p123 = scmp.ne.s32.totalorder %s109, %s110
      %p124 = scmp.eq.s32.totalorder %s18, 3
      %p125 = por %p123, %p124
      %p127 = scmp.ne.s32.totalorder %s110, %s126
      %p128 = scmp.eq.s32.totalorder %s18, 0
      %p129 = por %p127, %p128
      %p130 = scmp.le.s32.totalorder 1, %s12
      %p131 = scmp.lt.s32.totalorder %s12, 5
      %p132 = pnand %p130, %p131
      %p133 = pneg %p132
      // Predicated region
      $region9: #{tpu_custom_call.1} parent=5 // pred_check
        _
      $region10: #{tpu_custom_call.1} parent=5 // pred_check_branch
        %135 = sbr.rel (%p132) target = $region12
      $region11: #{tpu_custom_call.1} parent=5 // pred_region
        %s136 = ssub.s32 %s12, 1
        // Predicated region
        $region13: #{tpu_custom_call.1} parent=11 // pred_check
          %p137 = pneg %p73
        $region14: #{tpu_custom_call.1} parent=11 // pred_check_branch
          %139 = sbr.rel (%p137) target = $region16
        $region15: #{tpu_custom_call.1} parent=11 // pred_region
          _
        $region16: #{tpu_custom_call.1} parent=11 // pred_fallthru
          _
        // Predicated region
        $region17: #{tpu_custom_call.1} parent=11 // pred_check
          %p140 = pneg %p94
        $region18: #{tpu_custom_call.1} parent=11 // pred_check_branch
          %142 = sbr.rel (%p140) target = $region20
        $region19: #{tpu_custom_call.1} parent=11 // pred_region
          _
        $region20: #{tpu_custom_call.1} parent=11 // pred_fallthru
          _
      $region12: #{tpu_custom_call.1} parent=5 // pred_fallthru
        _
      %p143 = scmp.lt.s32.totalorder %s12, 4
      // Predicated region
      $region21: #{tpu_custom_call.1} parent=5 // pred_check
        %p144 = pneg %p143
      $region22: #{tpu_custom_call.1} parent=5 // pred_check_branch
        %146 = sbr.rel (%p144) target = $region24
      $region23: #{tpu_custom_call.1} parent=5 // pred_region
        // Predicated region
        $region25: #{tpu_custom_call.1} parent=23 // pred_check
          %p147 = pneg %p46
        $region26: #{tpu_custom_call.1} parent=23 // pred_check_branch
          %149 = sbr.rel (%p147) target = $region28
        $region27: #{tpu_custom_call.1} parent=23 // pred_region
          %p150 = scmp.lt.s32.totalorder %s19, 1
          %s151 = scalar_select %p150, %s19, 1
          %p152 = scmp.lt.s32.totalorder %s20, 1
          %s153 = scalar_select %p152, %s20, 1
          %s154 = smul.addr %s151, 2
          %s155 = sadd.s32 %s153, %s154
          %s156 = smul.addr %s155, 8
          %s157 = scalar_lea.vmem %s0, %s156
        $region28: #{tpu_custom_call.1} parent=23 // pred_fallthru
          _
      $region24: #{tpu_custom_call.1} parent=5 // pred_fallthru
        _
      %p158 = scmp.le.s32.totalorder 1, %s12
      %p159 = scmp.lt.s32.totalorder %s12, 5
      %p160 = pnand %p158, %p159
      %p161 = pneg %p160
      // Predicated region
      $region29: #{tpu_custom_call.1} parent=5 // pred_check
        _
      $region30: #{tpu_custom_call.1} parent=5 // pred_check_branch
        %163 = sbr.rel (%p160) target = $region32
      $region31: #{tpu_custom_call.1} parent=5 // pred_region
        %s164 = ssub.s32 %s12, 1
        %p165 = scmp.lt.s32.totalorder %s21, 1
        %s166 = scalar_select %p165, %s21, 1
        %p167 = scmp.lt.s32.totalorder %s22, 1
        %s168 = scalar_select %p167, %s22, 1
        %s169 = smul.addr %s166, 2
        %s170 = sadd.s32 %s168, %s169
        %s171 = smul.addr %s170, 8
        %s172 = scalar_lea.vmem %s0, %s171
        %p173 = pneg %p52
        %p174 = pneg %p49
        %p175 = pneg %p73
        %p176 = pneg %p70
        %p177 = pneg %p94
        %p178 = pneg %p91
        %p179 = pneg %p122
        %p180 = pneg %p119
        %s181 = sand.u32 %s109, 1
        %s182 = scalar_lea.sflag [#allocation3], %s181
        %s183 = sand.u32 %s109, 1
        %s184 = smul.addr %s183, 8
        %s185 = scalar_lea.vmem [#allocation2], %s184
        %p186 = scmp.lt.s32.totalorder %s21, 1
        %s187 = scalar_select %p186, %s21, 1
        %p188 = scmp.lt.s32.totalorder %s22, 1
        %s189 = scalar_select %p188, %s22, 1
        %s190 = smul.addr %s187, 2
        %s191 = sadd.s32 %s189, %s190
        %s192 = smul.addr %s191, 8
        %s193 = scalar_lea.vmem %s0, %s192
        %v194 = vld [vmem:[%s193] sm:$0xff]
        %s195 = smul.u32 %s21, 2
        %s196 = sadd.s32 %s195, %s22
        %s197 = smul.u32 %s196, 2
        %s198 = scalar_lea.vmem %s1, %s197
        %v199 = vld [vmem:[%s198] sm:$0x3]
        %v200 = vlaneseq
        %v201 = vshrl.u32 %v200, 7
        %vm202 = vcmp.eq.s32.totalorder %v201, 0
        %v203 = vrot.slane %v194, 7
        %v204 = vsel %vm202, 1, 0
        %vm205 = vcmp.eq.s32.totalorder %v204, 1
        %v206 = vperm.slane %v199, 0
        %v207 = vsel %vm205, %v206, %v203
        %vm208 = vcmp.eq.s32.totalorder %v201, 7
        %v209 = vrot.slane %v194, 1
        %v210 = vsel %vm208, 1, 0
        %vm211 = vcmp.eq.s32.totalorder %v210, 1
        %v212 = vperm.slane %v199, 1
        %v213 = vsel %vm211, %v212, %v209
        %215 = vrot.lane.b32.xlu0 %v194, 4
        %v216 = vpop.permute.xlu0 %215
        %219 = vrot.lane.b32.xlu0 %v213, 8
        %v220 = vpop.permute.xlu0 %219
        %vm222 = vcmask 31744
        %v223 = vsel %vm222, %v207, %v216
        %vm224 = vcmask 64512
        %v225 = vsel %vm224, %v223, %v220
        %v226 = vld [vmem:[%s2] sm:$0xff]
        %v227 = vld [vmem:[%s2 + $0x8] sm:$0xf]
        %vm228 = vcmask 97280
        %v230 = vsel %vm228, %v225, 0
        %vm232 = vcmask 1043456
        %v234 = vsel %vm232, %v227, 0
        %236 = vmatpush.msra.mxu0 0.0
        %237 = vmatpush.msra.mxu0 0.0
        %238 = vmatpush.msra.mxu0 0.0
        %239 = vmatpush.msra.mxu0 0.0
        %240 = vmatpush.msra.mxu0 0.0
        %241 = vmatpush.msra.mxu0 0.0
        %242 = vmatpush.msra.mxu0 0.0
        %243 = vmatpush.msra.mxu0 0.0
        %244 = vmatpush.msra.mxu0 0.0
        %245 = vmatpush.msra.mxu0 0.0
        %246 = vmatpush.msra.mxu0 0.0
        %247 = vmatpush.msra.mxu0 0.0
        %248 = vmatpush.msra.mxu0 0.0
        %249 = vmatpush.msra.mxu0 0.0
        %250 = vmatpush.msra.mxu0 %v234
        %251 = vmatpush.msra.mxu0 %v226
        %252 = vmatmul.f32.gmra.mxu0 %v230
        %v253 = vpop.f32.mrf.mxu0
        %v254 = vadd.f32 0.0, %v253
        %255 = vdwg.mxu0
        %256 = vst [vmem:[%s185] sm:$0xff] %v254
        %s257 = sand.u32 %s109, 1
        %s258 = scalar_lea.sflag [#allocation3], %s257
        %s259 = sand.u32 %s109, 1
        %s260 = smul.addr %s259, 8
        %s261 = scalar_lea.vmem [#allocation2], %s260
        // Predicated region
        $region33: #{tpu_custom_call.1} parent=31 // pred_check
          %p262 = pneg %p119
        $region34: #{tpu_custom_call.1} parent=31 // pred_check_branch
          %264 = sbr.rel (%p262) target = $region36
        $region35: #{tpu_custom_call.1} parent=31 // pred_region
          %266 = vsyncadd %s258, 0
          %s267 = smul.addr %s21, 2
          %s268 = sadd.s32 %s22, %s267
          %s269 = smul.addr %s268, 8
          %s270 = scalar_lea.hbm %s3, %s269
          %s272 = sshll.u32 %s261, 4
          %s273 = int_to_ptr.vmem [resolvable:$true] %s272
          %s274 = sshll.u32 %s270, 4
          %s275 = int_to_ptr.hbm [resolvable:$true] %s274
          %277 = dma.vmem_to_hbm [thread:$0]  %s273, 128, %s275, %s258
        $region36: #{tpu_custom_call.1} parent=31 // pred_fallthru
          _
      $region32: #{tpu_custom_call.1} parent=5 // pred_fallthru
        _
      %p278 = scmp.le.s32.totalorder 2, %s12
      // Predicated region
      $region37: #{tpu_custom_call.1} parent=5 // pred_check
        %p279 = pneg %p278
      $region38: #{tpu_custom_call.1} parent=5 // pred_check_branch
        %281 = sbr.rel (%p279) target = $region40
      $region39: #{tpu_custom_call.1} parent=5 // pred_region
        %s282 = ssub.s32 %s12, 2
        // Predicated region
        $region41: #{tpu_custom_call.1} parent=39 // pred_check
          %p283 = pneg %p125
        $region42: #{tpu_custom_call.1} parent=39 // pred_check_branch
          %285 = sbr.rel (%p283) target = $region44
        $region43: #{tpu_custom_call.1} parent=39 // pred_region
          %s286 = sand.u32 %s110, 1
          %s287 = scalar_lea.sflag [#allocation3], %s286
          %s288 = sand.u32 %s110, 1
          %s289 = smul.addr %s288, 8
          %s290 = scalar_lea.vmem [#allocation2], %s289
          %292 = dma.done %s287, 128
        $region44: #{tpu_custom_call.1} parent=39 // pred_fallthru
          _
      $region40: #{tpu_custom_call.1} parent=5 // pred_fallthru
        _
    $region6: #{tpu_custom_call.1} parent=1 // loop_footer
      %s16 = sadd.s32 1, %s12
    $region7: #{tpu_custom_call.1} parent=1 // loop_footer_branch
      %11 = sbr.rel target = $region3
    $region8: #{tpu_custom_call.1} parent=1 // loop_exit
      _
    %293 = vsyncpa [#allocation3], 1
    %s294 = scalar_lea.sflag [#allocation3], 1
    %295 = vsyncpa %s294, 1

</llo_original>
